<compile_context>
chip_gen: v6e
topology: v6e:2x2x1
jax: 0.10.0
libtpu: 0.0.40
codegen_flags: <defaults>
</compile_context>

<pallas_src>
import jax
import jax.numpy as jnp
from jax.experimental import pallas as pl
from jax.experimental.pallas import tpu as pltpu


def _cdiv(a, b):
    return -(-a // b)


def _round_up(n, m):
    return _cdiv(n, m) * m


def _pad_to(a, shape, dtype):
    a = a.astype(dtype)
    if a.shape == tuple(shape):
        return a
    out = jnp.zeros(shape, dtype)
    return out.at[tuple(slice(0, s) for s in a.shape)].set(a)


def _vmem_budget_bytes():
    """~3/4 of physical VMEM (96 MiB on 128-MiB chips, 48 MiB on v7x)."""
    try:
        cap = int(pltpu.get_tpu_info().vmem_capacity_bytes)
    except Exception:
        cap = 128 * 1024 * 1024
    return (cap // 4) * 3


# ----------------------------- kernel bodies -----------------------------

def _ffn_resident_kernel(x_ref, w1_ref, b1_ref, w2_ref, b2_ref, o_ref):
    # Whole (padded) weights are VMEM-resident; 1-D grid over M tiles.
    x = x_ref[...].astype(w1_ref.dtype)                      # cast on the VPU
    h = jnp.dot(x, w1_ref[...], preferred_element_type=jnp.float32)
    h = jnp.maximum(h + b1_ref[...], 0.0)
    acc = jnp.dot(h.astype(w2_ref.dtype), w2_ref[...],
                  preferred_element_type=jnp.float32)
    o_ref[...] = (acc + b2_ref[...]).astype(o_ref.dtype)


def _ffn_reduce_kernel_f32out(x_ref, w1_ref, b1_ref, w2_ref, b2_ref, o_ref):
    # H is a reduction grid axis; the f32 output block (resident across k)
    # doubles as the accumulator -> no scratch, no final copy.
    k = pl.program_id(1)
    x = x_ref[...].astype(w1_ref.dtype)
    h = jnp.dot(x, w1_ref[...], preferred_element_type=jnp.float32)
    h = jnp.maximum(h + b1_ref[...], 0.0)
    contrib = jnp.dot(h.astype(w2_ref.dtype), w2_ref[...],
                      preferred_element_type=jnp.float32)

    @pl.when(k == 0)
    def _():
        o_ref[...] = contrib + b2_ref[...]

    @pl.when(k > 0)
    def _():
        o_ref[...] += contrib


def _ffn_reduce_kernel_scratch(x_ref, w1_ref, b1_ref, w2_ref, b2_ref, o_ref,
                               acc_ref):
    # Narrow (e.g. bf16) output: accumulate in f32 scratch, cast on last k.
    k = pl.program_id(1)

    @pl.when(k == 0)
    def _():
        acc_ref[...] = jnp.zeros_like(acc_ref)

    x = x_ref[...].astype(w1_ref.dtype)
    h = jnp.dot(x, w1_ref[...], preferred_element_type=jnp.float32)
    h = jnp.maximum(h + b1_ref[...], 0.0)
    acc_ref[...] += jnp.dot(h.astype(w2_ref.dtype), w2_ref[...],
                            preferred_element_type=jnp.float32)

    @pl.when(k == pl.num_programs(1) - 1)
    def _():
        o_ref[...] = (acc_ref[...] + b2_ref[...]).astype(o_ref.dtype)


# ------------------------------- wrapper ---------------------------------

def feed_forward(x, w1, b1, w2, b2, *, tile_m=512, tile_h=2048):
    """x: (B, T, C). w1: (C, H), b1: (H,), w2: (H, C), b2: (C,). -> (B, T, C)."""
    B, T, C = x.shape
    H = w1.shape[1]
    M = B * T

    out_dtype = x.dtype
    out_f32 = out_dtype == jnp.float32
    weight_dtype = jnp.bfloat16
    x_item = x.dtype.itemsize
    o_item = jnp.zeros((), out_dtype).dtype.itemsize

    budget = _vmem_budget_bytes()

    Cp = _round_up(C, 128)            # lane-dense last dim for x / W2 / output
    Hp0 = _round_up(H, 128)

    # ---- M tiling: large tiles (weight arithmetic intensity ~ tm FLOP/byte),
    #      but keep >= 2 M tiles so the "parallel" axis can shard across
    #      v7x's two TensorCores.
    if M >= 512:
        tm = min(_round_up(tile_m, 256), _round_up(M, 256))
        tm = min(tm, _round_up(_cdiv(M, 2), 256))
    else:
        tm = _round_up(M, 8)
    Mp = _round_up(M, tm)
    num_m_tiles = Mp // tm

    # ---- Choose weight-resident (1-D grid) vs. H-reduction path from a
    #      double-buffered VMEM estimate against the generation budget.
    resident_need = (2 * tm * Cp * x_item        # x blocks (double buffered)
                     + 2 * 2 * Cp * Hp0 * 2      # W1 + W2 (bf16, double buffered)
                     + 2 * tm * Cp * o_item      # output blocks
                     + tm * Hp0 * 6              # hidden activation f32 + bf16 copy
                     + 2 * (Hp0 + Cp) * 4        # biases
                     + (2 << 20))                # headroom
    use_resident = resident_need <= budget

    if use_resident:
        Hp = Hp0
        th = Hp0
    else:
        th = min(_round_up(tile_h, 128), Hp0)

        def _reduce_need(th_):
            return (2 * tm * Cp * x_item
                    + 2 * 2 * Cp * th_ * 2
                    + 2 * tm * Cp * o_item
                    + (0 if out_f32 else tm * Cp * 4)
                    + tm * th_ * 6
                    + 2 * (th_ + Cp) * 4
                    + (2 << 20))

        while th > 128 and _reduce_need(th) > budget:
            th -= 128
        Hp = _round_up(H, th)

    # ---- Operands. x keeps its original dtype (cast to bf16 inside the
    #      kernel) and is only copied if padding is actually required.
    #      Zero padding is exact: padded x cols hit zero W1 rows, padded
    #      hidden channels give relu(0) = 0, padded rows are sliced off.
    x2d = x.reshape(M, C)
    if (Mp, Cp) != (M, C):
        x2d = _pad_to(x2d, (Mp, Cp), x.dtype)
    w1p = _pad_to(w1, (Cp, Hp), weight_dtype)
    w2p = _pad_to(w2, (Hp, Cp), weight_dtype)
    b1p = _pad_to(b1.reshape(1, H), (1, Hp), jnp.float32)
    b2p = _pad_to(b2.reshape(1, C), (1, Cp), jnp.float32)

    flops = 2 * Mp * Cp * Hp * 2                 # two matmuls
    weight_fetches = 1 if use_resident else num_m_tiles
    bytes_accessed = (Mp * Cp * x_item
                      + weight_fetches * 2 * Cp * Hp * 2
                      + (Hp + Cp) * 4
                      + Mp * Cp * o_item)
    cost = pl.CostEstimate(flops=flops, transcendentals=0,
                           bytes_accessed=bytes_accessed)

    if use_resident:
        grid = (num_m_tiles,)
        in_specs = [
            pl.BlockSpec((tm, Cp), lambda i: (i, 0)),      # x rows
            pl.BlockSpec((Cp, Hp), lambda i: (0, 0)),      # W1: DMA'd once
            pl.BlockSpec((1, Hp), lambda i: (0, 0)),       # b1: DMA'd once
            pl.BlockSpec((Hp, Cp), lambda i: (0, 0)),      # W2: DMA'd once
            pl.BlockSpec((1, Cp), lambda i: (0, 0)),       # b2: DMA'd once
        ]
        out_specs = pl.BlockSpec((tm, Cp), lambda i: (i, 0))
        scratch_shapes = []
        kernel = _ffn_resident_kernel
        dim_sem = ("parallel",)
    else:
        grid = (num_m_tiles, Hp // th)
        in_specs = [
            pl.BlockSpec((tm, Cp), lambda i, k: (i, 0)),   # x rows (reused over k)
            pl.BlockSpec((Cp, th), lambda i, k: (0, k)),   # W1 hidden slice
            pl.BlockSpec((1, th), lambda i, k: (0, k)),    # b1 hidden slice
            pl.BlockSpec((th, Cp), lambda i, k: (k, 0)),   # W2 hidden slice
            pl.BlockSpec((1, Cp), lambda i, k: (0, 0)),    # b2 (grid-invariant)
        ]
        out_specs = pl.BlockSpec((tm, Cp), lambda i, k: (i, 0))
        if out_f32:
            scratch_shapes = []
            kernel = _ffn_reduce_kernel_f32out
        else:
            scratch_shapes = [pltpu.VMEM((tm, Cp), jnp.float32)]
            kernel = _ffn_reduce_kernel_scratch
        dim_sem = ("parallel", "arbitrary")

    out2d = pl.pallas_call(
        kernel,
        out_shape=jax.ShapeDtypeStruct((Mp, Cp), out_dtype),
        grid_spec=pltpu.PrefetchScalarGridSpec(
            num_scalar_prefetch=0,
            grid=grid,
            in_specs=in_specs,
            out_specs=out_specs,
            scratch_shapes=scratch_shapes,
        ),
        compiler_params=pltpu.CompilerParams(
            dimension_semantics=dim_sem,
            vmem_limit_bytes=budget,
        ),
        cost_estimate=cost,
    )(x2d, w1p, b1p, w2p, b2p)

    if (Mp, Cp) != (M, C):
        out2d = out2d[:M, :C]
    return out2d.reshape(B, T, C)


def _reference(x, w1, b1, w2, b2):
    h = jnp.maximum(jnp.einsum("btc,ch->bth", x, w1) + b1, 0.0)
    return jnp.einsum("bth,hc->btc", h, w2) + b2


if __name__ == "__main__":
    # Small shapes consistent with the module: batch=2, seq=8, n_embd=32.
    B, T, n_embd = 2, 8, 32
    hidden = 4 * n_embd                    # 128
    dropout = 0.1                          # identity at inference

    key = jax.random.PRNGKey(0)
    kx, k1, k2, k3, k4 = jax.random.split(key, 5)

    x = jax.random.normal(kx, (B, T, n_embd), dtype=jnp.float32)

    # Deterministic parameter init (PyTorch-style uniform bounds).
    bound1 = 1.0 / (n_embd ** 0.5)
    bound2 = 1.0 / (hidden ** 0.5)
    w1 = jax.random.uniform(k1, (n_embd, hidden), jnp.float32, -bound1, bound1)
    b1 = jax.random.uniform(k2, (hidden,), jnp.float32, -bound1, bound1)
    w2 = jax.random.uniform(k3, (hidden, n_embd), jnp.float32, -bound2, bound2)
    b2 = jax.random.uniform(k4, (n_embd,), jnp.float32, -bound2, bound2)

    out = feed_forward(x, w1, b1, w2, b2)
    out = jax.block_until_ready(out)

    ref = _reference(x, w1, b1, w2, b2)
    assert out.shape == (B, T, n_embd)
    # bf16 MXU inputs with f32 accumulation -> relaxed tolerance vs f32 reference.
    assert jnp.allclose(out, ref, atol=3e-2, rtol=3e-2), "mismatch vs reference"

    print("KERNEL_OK")
</pallas_src>

<mosaic_0001>
module attributes {stable_mosaic.version = 11 : i64} {
  func.func @_ffn_resident_kernel(%arg0: i32, %arg1: memref<16x128xf32, #tpu.memory_space<vmem>>, %arg2: memref<128x128xbf16, #tpu.memory_space<vmem>>, %arg3: memref<1x128xf32, #tpu.memory_space<vmem>>, %arg4: memref<128x128xbf16, #tpu.memory_space<vmem>>, %arg5: memref<1x128xf32, #tpu.memory_space<vmem>>, %arg6: memref<16x128xf32, #tpu.memory_space<vmem>>) attributes {dimension_semantics = [#tpu.dimension_semantics<parallel>], iteration_bounds = array<i64: 1>, scalar_prefetch = 0 : i64, scratch_operands = 0 : i64, tpu.core_type = #tpu.core_type<tc>, window_params = [{transform_indices = @transform_0, window_bounds = array<i64: 16, 128>}, {pipeline_mode = #tpu.pipeline_mode<synchronous>, transform_indices = @transform_1, window_bounds = array<i64: 128, 128>}, {pipeline_mode = #tpu.pipeline_mode<synchronous>, transform_indices = @transform_2, window_bounds = array<i64: 1, 128>}, {pipeline_mode = #tpu.pipeline_mode<synchronous>, transform_indices = @transform_3, window_bounds = array<i64: 128, 128>}, {pipeline_mode = #tpu.pipeline_mode<synchronous>, transform_indices = @transform_4, window_bounds = array<i64: 1, 128>}, {transform_indices = @transform_5, window_bounds = array<i64: 16, 128>}]} {
    %c0 = arith.constant 0 : index
    %c0_0 = arith.constant 0 : index
    %0 = vector.load %arg1[%c0, %c0_0] : memref<16x128xf32, #tpu.memory_space<vmem>>, vector<16x128xf32>
    %1 = arith.truncf %0 : vector<16x128xf32> to vector<16x128xbf16>
    %c0_1 = arith.constant 0 : index
    %c0_2 = arith.constant 0 : index
    %2 = vector.load %arg2[%c0_1, %c0_2] : memref<128x128xbf16, #tpu.memory_space<vmem>>, vector<128x128xbf16>
    %cst = arith.constant dense<0.000000e+00> : vector<16x128xf32>
    %3 = tpu.matmul %1, %2, %cst {dimension_numbers = #tpu.dot_dimension_numbers<[1], [0], [0], [1], [0, 0, 1, 1], [], []>} : vector<16x128xbf16>, vector<128x128xbf16>, vector<16x128xf32> -> vector<16x128xf32>
    %c0_3 = arith.constant 0 : index
    %c0_4 = arith.constant 0 : index
    %4 = vector.load %arg3[%c0_3, %c0_4] : memref<1x128xf32, #tpu.memory_space<vmem>>, vector<1x128xf32>
    %5 = vector.broadcast %4 : vector<1x128xf32> to vector<16x128xf32>
    %6 = arith.addf %3, %5 : vector<16x128xf32>
    %cst_5 = arith.constant 0.000000e+00 : f32
    %7 = vector.broadcast %cst_5 : f32 to vector<16x128xf32>
    %8 = arith.maximumf %6, %7 : vector<16x128xf32>
    %9 = arith.truncf %8 : vector<16x128xf32> to vector<16x128xbf16>
    %c0_6 = arith.constant 0 : index
    %c0_7 = arith.constant 0 : index
    %10 = vector.load %arg4[%c0_6, %c0_7] : memref<128x128xbf16, #tpu.memory_space<vmem>>, vector<128x128xbf16>
    %cst_8 = arith.constant dense<0.000000e+00> : vector<16x128xf32>
    %11 = tpu.matmul %9, %10, %cst_8 {dimension_numbers = #tpu.dot_dimension_numbers<[1], [0], [0], [1], [0, 0, 1, 1], [], []>} : vector<16x128xbf16>, vector<128x128xbf16>, vector<16x128xf32> -> vector<16x128xf32>
    %c0_9 = arith.constant 0 : index
    %c0_10 = arith.constant 0 : index
    %12 = vector.load %arg5[%c0_9, %c0_10] : memref<1x128xf32, #tpu.memory_space<vmem>>, vector<1x128xf32>
    %13 = vector.broadcast %12 : vector<1x128xf32> to vector<16x128xf32>
    %14 = arith.addf %11, %13 : vector<16x128xf32>
    %c0_11 = arith.constant 0 : index
    %c0_12 = arith.constant 0 : index
    %15 = vector.load %arg6[%c0_11, %c0_12] : memref<16x128xf32, #tpu.memory_space<vmem>>, vector<16x128xf32>
    tpu.vector_store %arg6[%c0_11, %c0_12], %14 {strides = array<i32>} : memref<16x128xf32, #tpu.memory_space<vmem>>, vector<16x128xf32>,
    return
  }
  func.func @transform_0(%arg0: i32) -> (i32, i32) {
    %c0_i32 = arith.constant 0 : i32
    %c0_i32_0 = arith.constant 0 : i32
    return %arg0, %c0_i32 : i32, i32
  }
  func.func @transform_1(%arg0: i32) -> (i32, i32) {
    %c0_i32 = arith.constant 0 : i32
    %c0_i32_0 = arith.constant 0 : i32
    %c0_i32_1 = arith.constant 0 : i32
    return %c0_i32, %c0_i32_0 : i32, i32
  }
  func.func @transform_2(%arg0: i32) -> (i32, i32) {
    %c0_i32 = arith.constant 0 : i32
    %c0_i32_0 = arith.constant 0 : i32
    %c0_i32_1 = arith.constant 0 : i32
    return %c0_i32, %c0_i32_0 : i32, i32
  }
  func.func @transform_3(%arg0: i32) -> (i32, i32) {
    %c0_i32 = arith.constant 0 : i32
    %c0_i32_0 = arith.constant 0 : i32
    %c0_i32_1 = arith.constant 0 : i32
    return %c0_i32, %c0_i32_0 : i32, i32
  }
  func.func @transform_4(%arg0: i32) -> (i32, i32) {
    %c0_i32 = arith.constant 0 : i32
    %c0_i32_0 = arith.constant 0 : i32
    %c0_i32_1 = arith.constant 0 : i32
    return %c0_i32, %c0_i32_0 : i32, i32
  }
  func.func @transform_5(%arg0: i32) -> (i32, i32) {
    %c0_i32 = arith.constant 0 : i32
    %c0_i32_0 = arith.constant 0 : i32
    return %arg0, %c0_i32 : i32, i32
  }
}

</mosaic_0001>

<llo_original>
// kernel: tpu_custom_call.1
$region0: #{tpu_custom_call.1}
  #allocation0 [shape = 'u32[]', space=smem, size = 0x4, offset = 0x4, fixed_abs, tag = 'smem constant byte address 0x4 - core index']
  #allocation1 [shape = 'u32[144,128]{1,0:T(1,128)}', space=vmem, size = 0x12000, scoped, tag = 'internal scratch']
  %s0 = inlined_call_operand.hbm [shape: f32[16,128], index: 0, kind: input, shape index: {}]
  %s1 = inlined_call_operand.hbm [shape: bf16[128,128], index: 1, kind: input, shape index: {}]
  %s2 = inlined_call_operand.vmem [shape: f32[1,128], index: 2, kind: input, shape index: {}]
  %s3 = inlined_call_operand.hbm [shape: bf16[128,128], index: 3, kind: input, shape index: {}]
  %s4 = inlined_call_operand.vmem [shape: f32[1,128], index: 4, kind: input, shape index: {}]
  %s5 = inlined_call_operand.hbm [shape: f32[16,128], index: 5, kind: output, shape index: {}]
  %s6 = sld [smem:[#allocation0]]
  $region42: #{tpu_custom_call.1} parent=0
    _
  %s8 = ssub.s32 1, %s6
  %s9 = scalar_select 0, %s8, %s6
  $region1: #{tpu_custom_call.1} parent=0
    #allocation2 [shape = 'u8[8192]{0}', space=vmem, size = 0x2000, scoped, tag = 'input window, operand 0, single buffered']
    #allocation3 [shape = 's32[1]{0}', space=sflag, size = 0x4, scoped, tag = 'scoped memory for tpu_custom_call.1']
    #allocation4 [shape = 's32[1]{0}', space=sflag, size = 0x4, scoped, tag = 'scoped memory for tpu_custom_call.1']
    #allocation5 [shape = 'u8[32768]{0}', space=vmem, size = 0x8000, scoped, tag = 'input window, operand 1, single buffered']
    #allocation6 [shape = 's32[1]{0}', space=sflag, size = 0x4, scoped, tag = 'scoped memory for tpu_custom_call.1']
    #allocation7 [shape = 'u8[32768]{0}', space=vmem, size = 0x8000, scoped, tag = 'input window, operand 3, single buffered']
    #allocation8 [shape = 'u8[8192]{0}', space=vmem, size = 0x2000, scoped, tag = 'output window, operand 0, single buffered']
    %10 = vsyncpa [#allocation3], 0
    %11 = vsyncpa [#allocation6], 0
    %12 = vsyncpa [#allocation4], 0
    // Predicated region
    $region2: #{tpu_custom_call.1} parent=1 // pred_check
      _
    $region3: #{tpu_custom_call.1} parent=1 // pred_check_branch
      %14 = sbr.rel (0) target = $region5
    $region4: #{tpu_custom_call.1} parent=1 // pred_region
      %s16 = ssub.s32 256, 256
      %17 = vsyncadd [#allocation3], %s16
      %s18 = sshll.u32 [#allocation2], 4
      %s19 = int_to_ptr.vmem [resolvable:$true] %s18
      %24 = dma.hbm_to_vmem [thread:$0]  %s0, 256, %s19, [#allocation3], 128, 128, 8
    $region5: #{tpu_custom_call.1} parent=1 // pred_fallthru
      _
    // Predicated region
    $region6: #{tpu_custom_call.1} parent=1 // pred_check
      _
    $region7: #{tpu_custom_call.1} parent=1 // pred_check_branch
      %26 = sbr.rel (0) target = $region9
    $region8: #{tpu_custom_call.1} parent=1 // pred_region
      %s28 = ssub.s32 1024, 1024
      %29 = vsyncadd [#allocation6], %s28
      %s30 = sshll.u32 [#allocation5], 4
      %s31 = int_to_ptr.vmem [resolvable:$true] %s30
      %36 = dma.hbm_to_vmem [thread:$0]  %s1, 1024, %s31, [#allocation6], 64, 64, 4
    $region9: #{tpu_custom_call.1} parent=1 // pred_fallthru
      _
    // Predicated region
    $region10: #{tpu_custom_call.1} parent=1 // pred_check
      _
    $region11: #{tpu_custom_call.1} parent=1 // pred_check_branch
      %38 = sbr.rel (0) target = $region13
    $region12: #{tpu_custom_call.1} parent=1 // pred_region
      _
    $region13: #{tpu_custom_call.1} parent=1 // pred_fallthru
      _
    // Predicated region
    $region14: #{tpu_custom_call.1} parent=1 // pred_check
      _
    $region15: #{tpu_custom_call.1} parent=1 // pred_check_branch
      %40 = sbr.rel (0) target = $region17
    $region16: #{tpu_custom_call.1} parent=1 // pred_region
      %s42 = ssub.s32 1024, 1024
      %43 = vsyncadd [#allocation6], %s42
      %s44 = sshll.u32 [#allocation7], 4
      %s45 = int_to_ptr.vmem [resolvable:$true] %s44
      %50 = dma.hbm_to_vmem [thread:$0]  %s3, 1024, %s45, [#allocation6], 64, 64, 4
    $region17: #{tpu_custom_call.1} parent=1 // pred_fallthru
      _
    // Predicated region
    $region18: #{tpu_custom_call.1} parent=1 // pred_check
      _
    $region19: #{tpu_custom_call.1} parent=1 // pred_check_branch
      %52 = sbr.rel (0) target = $region21
    $region20: #{tpu_custom_call.1} parent=1 // pred_region
      _
    $region21: #{tpu_custom_call.1} parent=1 // pred_fallthru
      _
    // Predicated region
    $region22: #{tpu_custom_call.1} parent=1 // pred_check
      _
    $region23: #{tpu_custom_call.1} parent=1 // pred_check_branch
      %54 = sbr.rel (0) target = $region25
    $region24: #{tpu_custom_call.1} parent=1 // pred_region
      %55 = dma.done [#allocation3], 256
    $region25: #{tpu_custom_call.1} parent=1 // pred_fallthru
      _
    // Predicated region
    $region26: #{tpu_custom_call.1} parent=1 // pred_check
      _
    $region27: #{tpu_custom_call.1} parent=1 // pred_check_branch
      %57 = sbr.rel (0) target = $region29
    $region28: #{tpu_custom_call.1} parent=1 // pred_region
      %58 = dma.done [#allocation6], 1024
    $region29: #{tpu_custom_call.1} parent=1 // pred_fallthru
      _
    // Predicated region
    $region30: #{tpu_custom_call.1} parent=1 // pred_check
      _
    $region31: #{tpu_custom_call.1} parent=1 // pred_check_branch
      %60 = sbr.rel (0) target = $region33
    $region32: #{tpu_custom_call.1} parent=1 // pred_region
      %61 = dma.done [#allocation6], 1024
    $region33: #{tpu_custom_call.1} parent=1 // pred_fallthru
      _
    %v63 = vld [vmem:[#allocation2] sm:$0xff]
    %v64 = vld [vmem:[#allocation2 + $0x8] sm:$0xff]
    %v65 = vpack.c.bf16 %v64, %v63
    %v66 = vld [vmem:[#allocation5] sm:$0xf]
    %v67 = vld [vmem:[#allocation5 + $0x4] sm:$0xf]
    %v68 = vld [vmem:[#allocation5 + $0x8] sm:$0xf]
    %v69 = vld [vmem:[#allocation5 + $0xc] sm:$0xf]
    %v70 = vld [vmem:[#allocation5 + $0x10] sm:$0xf]
    %v71 = vld [vmem:[#allocation5 + $0x14] sm:$0xf]
    %v72 = vld [vmem:[#allocation5 + $0x18] sm:$0xf]
    %v73 = vld [vmem:[#allocation5 + $0x1c] sm:$0xf]
    %v74 = vld [vmem:[#allocation5 + $0x20] sm:$0xf]
    %v75 = vld [vmem:[#allocation5 + $0x24] sm:$0xf]
    %v76 = vld [vmem:[#allocation5 + $0x28] sm:$0xf]
    %v77 = vld [vmem:[#allocation5 + $0x2c] sm:$0xf]
    %v78 = vld [vmem:[#allocation5 + $0x30] sm:$0xf]
    %v79 = vld [vmem:[#allocation5 + $0x34] sm:$0xf]
    %v80 = vld [vmem:[#allocation5 + $0x38] sm:$0xf]
    %v81 = vld [vmem:[#allocation5 + $0x3c] sm:$0xf]
    %v82 = vld [vmem:[%s2] sm:$0x1]
    %v84 = vlaneseq
    %v85 = vshrl.u32 %v84, 7
    %v86 = vsub.s32 0, %v85
    %v87 = vrot.slane %v82, %v86
    %v105 = vunpack.c.l.b16 %v66
    %v106 = vunpack.c.l.b16 %v67
    %v107 = vunpack.c.l.b16 %v68
    %v108 = vunpack.c.l.b16 %v69
    %v109 = vunpack.c.l.b16 %v70
    %v110 = vunpack.c.l.b16 %v71
    %v111 = vunpack.c.l.b16 %v72
    %v112 = vunpack.c.l.b16 %v73
    %v113 = vunpack.c.l.b16 %v74
    %v114 = vunpack.c.l.b16 %v75
    %v115 = vunpack.c.l.b16 %v76
    %v116 = vunpack.c.l.b16 %v77
    %v117 = vunpack.c.l.b16 %v78
    %v118 = vunpack.c.l.b16 %v79
    %v119 = vunpack.c.l.b16 %v80
    %v120 = vunpack.c.l.b16 %v81
    %v121 = vpack.c.b16 %v106, %v105
    %v122 = vpack.c.b16 %v108, %v107
    %v123 = vpack.c.b16 %v110, %v109
    %v124 = vpack.c.b16 %v112, %v111
    %v125 = vpack.c.b16 %v114, %v113
    %v126 = vpack.c.b16 %v116, %v115
    %v127 = vpack.c.b16 %v118, %v117
    %v128 = vpack.c.b16 %v120, %v119
    %137 = vmatprep.subr.bf16.mxu0 0
    %138 = vmatpush1.bf16.msra.mxu0 %v128
    %139 = vmatprep.subr.bf16.mxu0 0
    %140 = vmatpush1.bf16.msra.mxu0 %v127
    %141 = vmatprep.subr.bf16.mxu0 0
    %142 = vmatpush1.bf16.msra.mxu0 %v126
    %143 = vmatprep.subr.bf16.mxu0 0
    %144 = vmatpush1.bf16.msra.mxu0 %v125
    %145 = vmatprep.subr.bf16.mxu0 0
    %146 = vmatpush1.bf16.msra.mxu0 %v124
    %147 = vmatprep.subr.bf16.mxu0 0
    %148 = vmatpush1.bf16.msra.mxu0 %v123
    %149 = vmatprep.subr.bf16.mxu0 0
    %150 = vmatpush1.bf16.msra.mxu0 %v122
    %151 = vmatprep.subr.bf16.mxu0 0
    %152 = vmatpush1.bf16.msra.mxu0 %v121
    %153 = vmatprep.subr.bf16.mxu0 0
    %154 = vmatpush2.bf16.msra.mxu0 0
    %155 = vmatprep.subr.bf16.mxu0 0
    %156 = vmatpush2.bf16.msra.mxu0 0
    %157 = vmatprep.subr.bf16.mxu0 0
    %158 = vmatpush2.bf16.msra.mxu0 0
    %159 = vmatprep.subr.bf16.mxu0 0
    %160 = vmatpush2.bf16.msra.mxu0 0
    %161 = vmatprep.subr.bf16.mxu0 0
    %162 = vmatpush2.bf16.msra.mxu0 0
    %163 = vmatprep.subr.bf16.mxu0 0
    %164 = vmatpush2.bf16.msra.mxu0 0
    %165 = vmatprep.subr.bf16.mxu0 0
    %166 = vmatpush2.bf16.msra.mxu0 0
    %167 = vmatprep.subr.bf16.mxu0 0
    %168 = vmatpush2.bf16.msra.mxu0 0
    %169 = vmatprep.mubr.bf16.mxu0 0
    %170 = vmatmul.mubr.bf16.gmra.mxu0 %v65
    %v171 = vpop.f32.mrf.mxu0
    %v172 = vadd.f32 %v87, %v171
    %v173 = vpop.f32.mrf.mxu0
    %v174 = vpop.f32.mrf.mxu0
    %v175 = vadd.f32 %v87, %v174
    %v176 = vpop.f32.mrf.mxu0
    %177 = vdwg.mxu0
    %v178 = vmax.f32 %v172, 0.0
    %v179 = vmax.f32 %v175, 0.0
    %v180 = vpack.c.bf16 %v179, %v178
    %v181 = vld [vmem:[#allocation7] sm:$0xf]
    %v182 = vld [vmem:[#allocation7 + $0x4] sm:$0xf]
    %v183 = vld [vmem:[#allocation7 + $0x8] sm:$0xf]
    %v184 = vld [vmem:[#allocation7 + $0xc] sm:$0xf]
    %v185 = vld [vmem:[#allocation7 + $0x10] sm:$0xf]
    %v186 = vld [vmem:[#allocation7 + $0x14] sm:$0xf]
    %v187 = vld [vmem:[#allocation7 + $0x18] sm:$0xf]
    %v188 = vld [vmem:[#allocation7 + $0x1c] sm:$0xf]
    %v189 = vld [vmem:[#allocation7 + $0x20] sm:$0xf]
    %v190 = vld [vmem:[#allocation7 + $0x24] sm:$0xf]
    %v191 = vld [vmem:[#allocation7 + $0x28] sm:$0xf]
    %v192 = vld [vmem:[#allocation7 + $0x2c] sm:$0xf]
    %v193 = vld [vmem:[#allocation7 + $0x30] sm:$0xf]
    %v194 = vld [vmem:[#allocation7 + $0x34] sm:$0xf]
    %v195 = vld [vmem:[#allocation7 + $0x38] sm:$0xf]
    %v196 = vld [vmem:[#allocation7 + $0x3c] sm:$0xf]
    %v197 = vld [vmem:[%s4] sm:$0x1]
    %v199 = vlaneseq
    %v200 = vshrl.u32 %v199, 7
    %v201 = vsub.s32 0, %v200
    %v202 = vrot.slane %v197, %v201
    %v220 = vunpack.c.l.b16 %v181
    %v221 = vunpack.c.l.b16 %v182
    %v222 = vunpack.c.l.b16 %v183
    %v223 = vunpack.c.l.b16 %v184
    %v224 = vunpack.c.l.b16 %v185
    %v225 = vunpack.c.l.b16 %v186
    %v226 = vunpack.c.l.b16 %v187
    %v227 = vunpack.c.l.b16 %v188
    %v228 = vunpack.c.l.b16 %v189
    %v229 = vunpack.c.l.b16 %v190
    %v230 = vunpack.c.l.b16 %v191
    %v231 = vunpack.c.l.b16 %v192
    %v232 = vunpack.c.l.b16 %v193
    %v233 = vunpack.c.l.b16 %v194
    %v234 = vunpack.c.l.b16 %v195
    %v235 = vunpack.c.l.b16 %v196
    %v236 = vpack.c.b16 %v221, %v220
    %v237 = vpack.c.b16 %v223, %v222
    %v238 = vpack.c.b16 %v225, %v224
    %v239 = vpack.c.b16 %v227, %v226
    %v240 = vpack.c.b16 %v229, %v228
    %v241 = vpack.c.b16 %v231, %v230
    %v242 = vpack.c.b16 %v233, %v232
    %v243 = vpack.c.b16 %v235, %v234
    %252 = vmatprep.subr.bf16.mxu0 0
    %253 = vmatpush1.bf16.msra.mxu0 %v243
    %254 = vmatprep.subr.bf16.mxu0 0
    %255 = vmatpush1.bf16.msra.mxu0 %v242
    %256 = vmatprep.subr.bf16.mxu0 0
    %257 = vmatpush1.bf16.msra.mxu0 %v241
    %258 = vmatprep.subr.bf16.mxu0 0
    %259 = vmatpush1.bf16.msra.mxu0 %v240
    %260 = vmatprep.subr.bf16.mxu0 0
    %261 = vmatpush1.bf16.msra.mxu0 %v239
    %262 = vmatprep.subr.bf16.mxu0 0
    %263 = vmatpush1.bf16.msra.mxu0 %v238
    %264 = vmatprep.subr.bf16.mxu0 0
    %265 = vmatpush1.bf16.msra.mxu0 %v237
    %266 = vmatprep.subr.bf16.mxu0 0
    %267 = vmatpush1.bf16.msra.mxu0 %v236
    %268 = vmatprep.subr.bf16.mxu0 0
    %269 = vmatpush2.bf16.msra.mxu0 0
    %270 = vmatprep.subr.bf16.mxu0 0
    %271 = vmatpush2.bf16.msra.mxu0 0
    %272 = vmatprep.subr.bf16.mxu0 0
    %273 = vmatpush2.bf16.msra.mxu0 0
    %274 = vmatprep.subr.bf16.mxu0 0
    %275 = vmatpush2.bf16.msra.mxu0 0
    %276 = vmatprep.subr.bf16.mxu0 0
    %277 = vmatpush2.bf16.msra.mxu0 0
    %278 = vmatprep.subr.bf16.mxu0 0
    %279 = vmatpush2.bf16.msra.mxu0 0
    %280 = vmatprep.subr.bf16.mxu0 0
    %281 = vmatpush2.bf16.msra.mxu0 0
    %282 = vmatprep.subr.bf16.mxu0 0
    %283 = vmatpush2.bf16.msra.mxu0 0
    %284 = vmatprep.mubr.bf16.mxu0 0
    %285 = vmatmul.mubr.bf16.gmra.mxu0 %v180
    %v286 = vpop.f32.mrf.mxu0
    %v287 = vadd.f32 %v202, %v286
    %v288 = vpop.f32.mrf.mxu0
    %v289 = vpop.f32.mrf.mxu0
    %v290 = vadd.f32 %v202, %v289
    %v291 = vpop.f32.mrf.mxu0
    %292 = vdwg.mxu0
    %293 = vst [vmem:[#allocation8] sm:$0xff] %v287
    %294 = vst [vmem:[#allocation8 + $0x8] sm:$0xff] %v290
    // Predicated region
    $region34: #{tpu_custom_call.1} parent=1 // pred_check
      _
    $region35: #{tpu_custom_call.1} parent=1 // pred_check_branch
      %296 = sbr.rel (0) target = $region37
    $region36: #{tpu_custom_call.1} parent=1 // pred_region
      %s298 = ssub.s32 256, 256
      %299 = vsyncadd [#allocation4], %s298
      %s300 = sshll.u32 [#allocation8], 4
      %s301 = int_to_ptr.vmem [resolvable:$true] %s300
      %306 = dma.vmem_to_hbm [thread:$0]  %s301, 256, %s5, [#allocation4], 128, 128, 8
    $region37: #{tpu_custom_call.1} parent=1 // pred_fallthru
      _
    // Predicated region
    $region38: #{tpu_custom_call.1} parent=1 // pred_check
      _
    $region39: #{tpu_custom_call.1} parent=1 // pred_check_branch
      %308 = sbr.rel (0) target = $region41
    $region40: #{tpu_custom_call.1} parent=1 // pred_region
      %309 = dma.done [#allocation4], 256
    $region41: #{tpu_custom_call.1} parent=1 // pred_fallthru
      _
    %310 = vsyncpa [#allocation3], 1
    %311 = vsyncpa [#allocation6], 1
    %312 = vsyncpa [#allocation4], 1

</llo_original>
